<compile_context>
chip_gen: v5e
topology: v5e:2x2
jax: 0.10.0
libtpu: 0.0.40
codegen_flags: <defaults>
</compile_context>

<pallas_src>
import jax
import jax.numpy as jnp
from jax.experimental import pallas as pl
from jax.experimental.pallas import tpu as pltpu

_TARGET_BLOCK_BYTES = 2 * 1024 * 1024     # ~2 MiB/step saturates HBM roofline
_MAX_BLOCK_BYTES = 4 * 1024 * 1024        # hard cap on one input block
_MAX_VMEM_LIMIT_BYTES = 24 * 1024 * 1024  # stay well under v7x 32 MiB scoped


def _round_up(v, m):
    return -(-v // m) * m


def _physical_vmem_bytes():
    """Generation-aware VMEM query (v7x: 64 MiB/TC vs 128 MiB on v5e/v6e)."""
    try:
        return int(pltpu.get_tpu_info().vmem_capacity_bytes)
    except Exception:
        return 64 * 1024 * 1024  # conservative default (v7x)


def _pick_lane_tile(c_pad, hw, dtype_bytes):
    """Lane tile over flattened H*W: full extent if it fits the target,
    otherwise the largest multiple of 128 whose (c_pad, T) tile ~= target."""
    if hw <= 128 or c_pad * hw * dtype_bytes <= _TARGET_BLOCK_BYTES:
        return hw
    t_cap = max(128, (_TARGET_BLOCK_BYTES // (c_pad * dtype_bytes)) // 128 * 128)
    return max(128, min((hw // 128) * 128, t_cap))


def _pick_batch_block(n, per_image_block_bytes):
    """How many batch elements to fold into one block (None => don't fold).

    Valid sizes are N itself or a multiple of 8 (output-tile sublane rule)."""
    cands = sorted(set([n] + list(range(8, n, 8))))
    under_cap = [b for b in cands if b * per_image_block_bytes <= _MAX_BLOCK_BYTES]
    if not under_cap:
        return None  # even min(n, 8) images would exceed the block cap
    reach = [b for b in under_cap if b * per_image_block_bytes >= _TARGET_BLOCK_BYTES]
    if reach:
        return min(reach)
    b = max(under_cap)
    # Whole batch fits one (small) block: split into two sublane-valid halves
    # so v7x's two TensorCores both get a grid step (no-op on v5e/v6e).
    if b == n and n >= 16:
        half = _round_up((n + 1) // 2, 8)
        if half < n:
            b = half
    return b


def visualization_forward(x):
    """Pallas equivalent of Visualization.forward: mean over dim=1 (channels).

    x: (N, C, H, W)  ->  (N, H, W), same floating dtype as x.
    """
    if not jnp.issubdtype(x.dtype, jnp.floating):
        raise TypeError(
            "Visualization.forward expects a floating-point input "
            f"(torch.mean raises on integer tensors); got {x.dtype}")
    n, c, h, w = x.shape
    hw = h * w
    dtype_bytes = jnp.dtype(x.dtype).itemsize
    c_pad = _round_up(c, 8)  # sublane padding of the (C, T) tile in VMEM

    t = _pick_lane_tile(c_pad, hw, dtype_bytes)
    num_tiles = pl.cdiv(hw, t)
    per_image_block = c_pad * t * dtype_bytes

    b_n = None
    if n > 1 and num_tiles == 1 and per_image_block < _TARGET_BLOCK_BYTES:
        b_n = _pick_batch_block(n, per_image_block)
    batch_blocked = b_n is not None
    if not batch_blocked:
        b_n = 1

    x3 = x.reshape(n, c, hw)
    inv_c = 1.0 / float(c)  # compile-time constant: sum * (1/C)

    # VMEM accounting (double-buffered in + out, with sublane padding) and an
    # explicit scoped limit so no generation hits a VMEM cliff or silently
    # shrinks pipelining.
    in_block = b_n * c_pad * t * dtype_bytes
    out_block = _round_up(b_n, 8) * t * dtype_bytes
    required = 2 * (in_block + out_block)
    vmem_limit = int(min(_MAX_VMEM_LIMIT_BYTES,
                         _physical_vmem_bytes() // 2,
                         max(required + (4 << 20), 8 << 20)))

    compiler_params = pltpu.CompilerParams(
        dimension_semantics=("parallel", "parallel"),
        vmem_limit_bytes=vmem_limit,
    )
    cost = pl.CostEstimate(
        flops=n * c * hw,
        transcendentals=0,
        bytes_accessed=(n * c * hw + n * hw) * dtype_bytes,
    )

    # NOTE: a partial final lane tile (hw % t != 0) is only correct because
    # the reduction is over C (never across the lane axis) and the partial
    # output store is masked; a future lane-axis reduction must mask padding.
    # TODO(synk): for very large C (> ~16K) add an 'arbitrary' grid axis over
    # C with an f32 VMEM accumulator; not needed for visualization inputs.
    # (pipeline_mode=pl.Buffered(3) on the input spec is a further option if
    #  DMA chunk-issue latency is ever exposed for tiny hw.)

    if batch_blocked:
        def kernel(x_ref, o_ref):
            # x_ref: (b_n, C, T), o_ref: (b_n, T). f32 accumulation in-reduce.
            s = jnp.sum(x_ref[...], axis=1, dtype=jnp.float32)
            o_ref[...] = (s * inv_c).astype(o_ref.dtype)

        out = pl.pallas_call(
            kernel,
            out_shape=jax.ShapeDtypeStruct((n, hw), x.dtype),
            grid_spec=pl.GridSpec(
                grid=(pl.cdiv(n, b_n), num_tiles),
                in_specs=[pl.BlockSpec((b_n, c, t), lambda i, j: (i, 0, j))],
                out_specs=pl.BlockSpec((b_n, t), lambda i, j: (i, j)),
            ),
            compiler_params=compiler_params,
            cost_estimate=cost,
        )(x3)
        return out.reshape(n, h, w)

    def kernel(x_ref, o_ref):
        # x_ref: (1, C, T), o_ref: (1, 1, T). f32 accumulation in-reduce.
        s = jnp.sum(x_ref[...], axis=1, keepdims=True, dtype=jnp.float32)
        o_ref[...] = (s * inv_c).astype(o_ref.dtype)

    out = pl.pallas_call(
        kernel,
        out_shape=jax.ShapeDtypeStruct((n, 1, hw), x.dtype),
        grid_spec=pl.GridSpec(
            grid=(n, num_tiles),
            in_specs=[pl.BlockSpec((1, c, t), lambda i, j: (i, 0, j))],
            out_specs=pl.BlockSpec((1, 1, t), lambda i, j: (i, 0, j)),
        ),
        compiler_params=compiler_params,
        cost_estimate=cost,
    )(x3)
    return out.reshape(n, h, w)


if __name__ == "__main__":
    key = jax.random.PRNGKey(0)

    def _check(idx, shape):
        x = jax.random.normal(jax.random.fold_in(key, idx), shape,
                              dtype=jnp.float32)
        out = jax.block_until_ready(visualization_forward(x))
        ref = jnp.mean(x, axis=1)
        assert out.shape == ref.shape, (shape, out.shape, ref.shape)
        assert jnp.allclose(out, ref, atol=1e-5, rtol=1e-5), shape

    # Canonical small case: batch-blocked, one (N, C, HW) block, dense store.
    _check(0, (2, 4, 16, 16))
    # Batch-blocked with b_n=16 -> grid (2, 1): megacore split + mult-of-8 blocks.
    _check(1, (32, 4, 32, 32))
    # Per-image mode with lane tiling and a masked partial final lane tile.
    _check(2, (1, 128, 65, 64))

    print("KERNEL_OK")
</pallas_src>

<mosaic_0001>
module attributes {stable_mosaic.version = 11 : i64} {
  func.func @kernel(%arg0: i32, %arg1: i32, %arg2: memref<2x4x256xf32, #tpu.memory_space<vmem>>, %arg3: memref<2x256xf32, #tpu.memory_space<vmem>>) attributes {dimension_semantics = [#tpu.dimension_semantics<parallel>, #tpu.dimension_semantics<parallel>], iteration_bounds = array<i64: 1, 1>, scalar_prefetch = 0 : i64, scratch_operands = 0 : i64, tpu.core_type = #tpu.core_type<tc>, window_params = [{transform_indices = @transform_0, window_bounds = array<i64: 2, 4, 256>}, {transform_indices = @transform_1, window_bounds = array<i64: 2, 256>}]} {
    %c0 = arith.constant 0 : index
    %c0_0 = arith.constant 0 : index
    %c0_1 = arith.constant 0 : index
    %0 = vector.load %arg2[%c0, %c0_0, %c0_1] : memref<2x4x256xf32, #tpu.memory_space<vmem>>, vector<2x4x256xf32>
    %cst = arith.constant dense<0.000000e+00> : vector<2x256xf32>
    %1 = vector.multi_reduction <add>, %0, %cst [1] : vector<2x4x256xf32> to vector<2x256xf32>
    %cst_2 = arith.constant 2.500000e-01 : f32
    %2 = vector.broadcast %cst_2 : f32 to vector<2x256xf32>
    %3 = arith.mulf %1, %2 : vector<2x256xf32>
    %c0_3 = arith.constant 0 : index
    %c0_4 = arith.constant 0 : index
    %4 = vector.load %arg3[%c0_3, %c0_4] : memref<2x256xf32, #tpu.memory_space<vmem>>, vector<2x256xf32>
    tpu.vector_store %arg3[%c0_3, %c0_4], %3 {strides = array<i32>} : memref<2x256xf32, #tpu.memory_space<vmem>>, vector<2x256xf32>,
    return
  }
  func.func @transform_0(%arg0: i32, %arg1: i32) -> (i32, i32, i32) {
    %c0_i32 = arith.constant 0 : i32
    %c0_i32_0 = arith.constant 0 : i32
    return %arg0, %c0_i32, %arg1 : i32, i32, i32
  }
  func.func @transform_1(%arg0: i32, %arg1: i32) -> (i32, i32) {
    %c0_i32 = arith.constant 0 : i32
    return %arg0, %arg1 : i32, i32
  }
}

</mosaic_0001>

<llo_original>
// kernel: tpu_custom_call.1
$region0: #{tpu_custom_call.1}
  #allocation0 [shape = 'u32[]', space=smem, size = 0x4, offset = 0x4, fixed_abs, tag = 'smem constant byte address 0x4 - core index']
  #allocation1 [shape = 'u32[72,128]{1,0:T(1,128)}', space=vmem, size = 0x9000, scoped, tag = 'internal scratch']
  %s0 = inlined_call_operand.hbm [shape: f32[2,4,256], index: 0, kind: input, shape index: {}]
  %s1 = inlined_call_operand.hbm [shape: f32[2,256], index: 1, kind: output, shape index: {}]
  %s2 = sld [smem:[#allocation0]]
  $region18: #{tpu_custom_call.1} parent=0
    _
  %s4 = ssub.s32 1, %s2
  %s5 = scalar_select 0, %s4, %s2
  $region1: #{tpu_custom_call.1} parent=0
    #allocation2 [shape = 'u8[8192]{0}', space=vmem, size = 0x2000, scoped, tag = 'input window, operand 0, single buffered']
    #allocation3 [shape = 's32[1]{0}', space=sflag, size = 0x4, scoped, tag = 'scoped memory for tpu_custom_call.1']
    #allocation4 [shape = 's32[1]{0}', space=sflag, size = 0x4, scoped, tag = 'scoped memory for tpu_custom_call.1']
    #allocation5 [shape = 'u8[2048]{0}', space=vmem, size = 0x800, scoped, tag = 'output window, operand 0, single buffered']
    %6 = vsyncpa [#allocation3], 0
    %7 = vsyncpa [#allocation4], 0
    // Predicated region
    $region2: #{tpu_custom_call.1} parent=1 // pred_check
      _
    $region3: #{tpu_custom_call.1} parent=1 // pred_check_branch
      %9 = sbr.rel (0) target = $region5
    $region4: #{tpu_custom_call.1} parent=1 // pred_region
      %11 = vsyncadd [#allocation3], 0
      %s12 = sshll.u32 %s0, 4
      %s13 = int_to_ptr.hbm [resolvable:$true] %s12
      %s14 = sshll.u32 [#allocation2], 4
      %s15 = int_to_ptr.vmem [resolvable:$true] %s14
      %20 = dma.hbm_to_vmem [thread:$0]  %s13, 256, %s15, [#allocation3], 128, 128, 8
    $region5: #{tpu_custom_call.1} parent=1 // pred_fallthru
      _
    // Predicated region
    $region6: #{tpu_custom_call.1} parent=1 // pred_check
      _
    $region7: #{tpu_custom_call.1} parent=1 // pred_check_branch
      %22 = sbr.rel (0) target = $region9
    $region8: #{tpu_custom_call.1} parent=1 // pred_region
      %24 = dma.done [#allocation3], 256
    $region9: #{tpu_custom_call.1} parent=1 // pred_fallthru
      _
    %v25 = vld [vmem:[#allocation2] sm:$0xff]
    %v26 = vld [vmem:[#allocation2 + $0x8] sm:$0xff]
    %29 = vst [vmem:[#allocation1] ss:$2 sm:$0xff] %v25
    %v30 = vld.sshfl [vmem:[#allocation1] sm:$0xff pattern:$0x75316420]
    %v31 = vld.sshfl [vmem:[#allocation1 + $0x8] sm:$0xff pattern:$0x75316420]
    %s32 = scalar_lea.vmem [#allocation1], 16
    %33 = vst [vmem:[%s32] ss:$2 sm:$0xff] %v26
    %v34 = vld.sshfl [vmem:[#allocation1 + $0x10] sm:$0xff pattern:$0x75316420]
    %v35 = vld.sshfl [vmem:[#allocation1 + $0x18] sm:$0xff pattern:$0x75316420]
    %vm40 = vcmask 1043456
    %v41 = vsel %vm40, %v30, 0.0
    %v42 = vrot.slane %v41, 4
    %v43 = vadd.f32 %v41, %v42
    %v44 = vrot.slane %v43, 2
    %v45 = vadd.f32 %v43, %v44
    %v46 = vrot.slane %v45, 1
    %v47 = vadd.f32 %v45, %v46
    %v48 = vsel %vm40, %v31, 0.0
    %v49 = vrot.slane %v48, 4
    %v50 = vadd.f32 %v48, %v49
    %v51 = vrot.slane %v50, 2
    %v52 = vadd.f32 %v50, %v51
    %v53 = vrot.slane %v52, 1
    %v54 = vadd.f32 %v52, %v53
    %v55 = vsel %vm40, %v34, 0.0
    %v56 = vrot.slane %v55, 4
    %v57 = vadd.f32 %v55, %v56
    %v58 = vrot.slane %v57, 2
    %v59 = vadd.f32 %v57, %v58
    %v60 = vrot.slane %v59, 1
    %v61 = vadd.f32 %v59, %v60
    %v62 = vsel %vm40, %v35, 0.0
    %v63 = vrot.slane %v62, 4
    %v64 = vadd.f32 %v62, %v63
    %v65 = vrot.slane %v64, 2
    %v66 = vadd.f32 %v64, %v65
    %v67 = vrot.slane %v66, 1
    %v68 = vadd.f32 %v66, %v67
    %v69 = vmul.f32 %v47, 0.25
    %v70 = vmul.f32 %v54, 0.25
    %v71 = vmul.f32 %v61, 0.25
    %v72 = vmul.f32 %v68, 0.25
    %v77 = vrot.slane %v70, 6
    %v78 = vrot.slane %v72, 6
    %vm79 = vcmask 1041408
    %v80 = vsel %vm79, %v69, %v77
    %v81 = vsel %vm79, %v71, %v78
    %vm82 = vcmask 1044484
    %v83 = vsel %vm82, %v80, %v80
    %vm84 = vcmask 1046534
    %v85 = vsel %vm84, %v80, %v83
    %v86 = vrot.slane %v81, 7
    %vm87 = vcmask 1041409
    %v88 = vsel %vm87, %v86, %v85
    %vm89 = vcmask 1043459
    %v90 = vsel %vm89, %v86, %v88
    %vm91 = vcmask 1045509
    %v92 = vsel %vm91, %v86, %v90
    %vm93 = vcmask 1047559
    %v94 = vsel %vm93, %v86, %v92
    %96 = vst [vmem:[#allocation5] sm:$0xf] %v94
    // Predicated region
    $region10: #{tpu_custom_call.1} parent=1 // pred_check
      _
    $region11: #{tpu_custom_call.1} parent=1 // pred_check_branch
      %98 = sbr.rel (0) target = $region13
    $region12: #{tpu_custom_call.1} parent=1 // pred_region
      %100 = vsyncadd [#allocation4], 0
      %s102 = sshll.u32 [#allocation5], 4
      %s103 = int_to_ptr.vmem [resolvable:$true] %s102
      %s104 = sshll.u32 %s1, 4
      %s105 = int_to_ptr.hbm [resolvable:$true] %s104
      %107 = dma.vmem_to_hbm [thread:$0]  %s103, 64, %s105, [#allocation4]
    $region13: #{tpu_custom_call.1} parent=1 // pred_fallthru
      _
    // Predicated region
    $region14: #{tpu_custom_call.1} parent=1 // pred_check
      _
    $region15: #{tpu_custom_call.1} parent=1 // pred_check_branch
      %109 = sbr.rel (0) target = $region17
    $region16: #{tpu_custom_call.1} parent=1 // pred_region
      %111 = dma.done [#allocation4], 64
    $region17: #{tpu_custom_call.1} parent=1 // pred_fallthru
      _
    %112 = vsyncpa [#allocation3], 1
    %113 = vsyncpa [#allocation4], 1

</llo_original>
